<compile_context>
chip_gen: v6e
topology: v6e:2x2x1
jax: 0.10.0
libtpu: 0.0.40
codegen_flags: <defaults>
</compile_context>

<pallas_src>
import jax
import jax.numpy as jnp
from jax.experimental import pallas as pl
from jax.experimental.pallas import tpu as pltpu


def _one_hot_kernel_flat(x_ref, o_ref):
    # x_ref: (n_tile, l_tile) int32 labels
    # o_ref: (n_tile, depth, l_tile) one-hot block (all classes per step)
    x = x_ref[...]
    depth = o_ref.shape[1]
    class_ids = jax.lax.broadcasted_iota(jnp.int32, (1, depth, 1), 1)
    o_ref[...] = (x[:, None, :] == class_ids).astype(o_ref.dtype)


def _one_hot_kernel_4d(x_ref, o_ref):
    # x_ref: (n_tile, h_tile, W) int32 labels
    # o_ref: (n_tile, depth, h_tile, W) one-hot block (all classes per step)
    x = x_ref[...]
    depth = o_ref.shape[1]
    class_ids = jax.lax.broadcasted_iota(jnp.int32, (1, depth, 1, 1), 1)
    o_ref[...] = (x[:, None, :, :] == class_ids).astype(o_ref.dtype)


def _round_down(x, m):
    return (x // m) * m


def _vmem_limit_bytes(block_bytes):
    # Double-buffered (in + out) blocks plus slack, capped below physical VMEM.
    needed = 2 * block_bytes + (4 << 20)
    try:
        cap = int(pltpu.get_tpu_info().vmem_capacity_bytes)
    except Exception:
        cap = 64 << 20  # v7x is the smallest generation (64 MiB)
    return min(max(32 << 20, needed), max(32 << 20, cap - (16 << 20)))


def _dim_semantics(num_spatial_tiles):
    # Only CORE_PARALLEL actually shards the grid across v7x's two TensorCores;
    # gate it on chip so v5e/v6e keep the known-good plain-parallel lowering.
    multi_core = False
    try:
        multi_core = "v7" in jax.devices()[0].device_kind.lower()
    except Exception:
        multi_core = False
    if multi_core and num_spatial_tiles >= 2:
        return (pltpu.PARALLEL, pltpu.CORE_PARALLEL)
    return (pltpu.PARALLEL, pltpu.PARALLEL)


def one_hot_forward(x_in, depth, *, target_tile_bytes=4 * 1024 * 1024,
                    out_dtype=jnp.float32):
    """Pallas equivalent of One_Hot(depth).forward(x_in).

    x_in: integer array of shape (N, 1, H, W) (or (N, H, W)), values in [0, depth)
    returns: (N, depth, H, W) array of `out_dtype` (float32 matches PyTorch's
    .float(); pass jnp.bfloat16 to halve output HBM traffic if the consumer allows).
    """
    if x_in.ndim == 4:
        assert x_in.shape[1] == 1, "expected single-channel label map (N,1,H,W)"
        x = x_in[:, 0]
    elif x_in.ndim == 3:
        x = x_in
    else:
        raise ValueError("expected (N,1,H,W) or (N,H,W) label input")
    assert jnp.issubdtype(x.dtype, jnp.integer), "label map must be integer typed"
    x = x.astype(jnp.int32)

    N, H, W = x.shape
    L = H * W
    itemsize = jnp.dtype(out_dtype).itemsize

    cost = pl.CostEstimate(
        flops=2 * N * depth * L,
        transcendentals=0,
        bytes_accessed=N * L * 4 + N * depth * L * itemsize,
    )

    if W % 128 == 0:
        # ---- native 4D layout: output layout is final, depth is non-minor ----
        row_bytes = depth * W * itemsize            # output bytes per (n, h) row
        n_tile = N
        if N * row_bytes * 8 > target_tile_bytes:
            n_tile = max(1, min(N, target_tile_bytes // (row_bytes * 8)))
        h_tile = max(8, _round_down(target_tile_bytes // max(n_tile * row_bytes, 1), 8))
        if h_tile >= H:
            h_tile = H                               # full dim is always legal
        grid = (pl.cdiv(N, n_tile), pl.cdiv(H, h_tile))

        block_bytes = n_tile * h_tile * W * (4 + depth * itemsize)
        return pl.pallas_call(
            _one_hot_kernel_4d,
            out_shape=jax.ShapeDtypeStruct((N, depth, H, W), out_dtype),
            grid=grid,
            in_specs=[pl.BlockSpec((n_tile, h_tile, W), lambda n, t: (n, t, 0))],
            out_specs=pl.BlockSpec((n_tile, depth, h_tile, W),
                                   lambda n, t: (n, 0, t, 0)),
            compiler_params=pltpu.CompilerParams(
                dimension_semantics=_dim_semantics(grid[1]),
                vmem_limit_bytes=_vmem_limit_bytes(block_bytes)),
            cost_estimate=cost,
        )(x)

    # ---- lane-dense flattened-spatial layout (W % 128 != 0, e.g. W < 128) ----
    col_bytes = depth * itemsize                     # output bytes per (n, lane) col
    n_tile = N
    if N > 8 and N * col_bytes * 512 > target_tile_bytes:
        # keep lanes >= 512 wide by tiling the batch (multiple of 8 so the
        # (n_tile, l_tile) input block satisfies the (8,128) constraint)
        n_tile = min(N, max(8, _round_down(target_tile_bytes // (col_bytes * 512), 8)))
    l_tile = max(128, _round_down(target_tile_bytes // max(n_tile * col_bytes, 1), 128))
    if l_tile >= L:
        l_tile = L                                   # full dim is always legal
    grid = (pl.cdiv(N, n_tile), pl.cdiv(L, l_tile))

    block_bytes = n_tile * l_tile * (4 + depth * itemsize)
    out_flat = pl.pallas_call(
        _one_hot_kernel_flat,
        out_shape=jax.ShapeDtypeStruct((N, depth, L), out_dtype),
        grid=grid,
        in_specs=[pl.BlockSpec((n_tile, l_tile), lambda n, t: (n, t))],
        out_specs=pl.BlockSpec((n_tile, depth, l_tile), lambda n, t: (n, 0, t)),
        compiler_params=pltpu.CompilerParams(
            dimension_semantics=_dim_semantics(grid[1]),
            vmem_limit_bytes=_vmem_limit_bytes(block_bytes)),
        cost_estimate=cost,
    )(x.reshape(N, L))
    return out_flat.reshape(N, depth, H, W)


if __name__ == "__main__":
    key = jax.random.PRNGKey(0)
    k1, k2 = jax.random.split(key)

    # Case 1: W < 128 -> flattened lane-dense path.
    depth = 4
    N, H, W = 2, 16, 16
    labels = jax.random.randint(k1, (N, 1, H, W), 0, depth, dtype=jnp.int32)
    out = jax.block_until_ready(one_hot_forward(labels, depth))
    ref = jnp.moveaxis(jax.nn.one_hot(labels[:, 0], depth, dtype=jnp.float32), -1, 1)
    assert out.shape == (N, depth, H, W), out.shape
    assert out.dtype == jnp.float32
    assert bool(jnp.all(out == ref))

    # Case 2: W % 128 == 0 -> native 4D path (no flatten / reshape relayout).
    depth2 = 4
    N2, H2, W2 = 2, 8, 128
    labels2 = jax.random.randint(k2, (N2, 1, H2, W2), 0, depth2, dtype=jnp.int32)
    out2 = jax.block_until_ready(one_hot_forward(labels2, depth2))
    ref2 = jnp.moveaxis(jax.nn.one_hot(labels2[:, 0], depth2, dtype=jnp.float32), -1, 1)
    assert out2.shape == (N2, depth2, H2, W2), out2.shape
    assert out2.dtype == jnp.float32
    assert bool(jnp.all(out2 == ref2))

    print("KERNEL_OK")
</pallas_src>

<mosaic_0001>
module attributes {stable_mosaic.version = 11 : i64} {
  func.func @_one_hot_kernel_flat(%arg0: i32, %arg1: i32, %arg2: memref<2x256xi32, #tpu.memory_space<vmem>>, %arg3: memref<2x4x256xf32, #tpu.memory_space<vmem>>) attributes {dimension_semantics = [#tpu.dimension_semantics<parallel>, #tpu.dimension_semantics<parallel>], iteration_bounds = array<i64: 1, 1>, scalar_prefetch = 0 : i64, scratch_operands = 0 : i64, tpu.core_type = #tpu.core_type<tc>, window_params = [{transform_indices = @transform_0, window_bounds = array<i64: 2, 256>}, {transform_indices = @transform_1, window_bounds = array<i64: 2, 4, 256>}]} {
    %c0 = arith.constant 0 : index
    %c0_0 = arith.constant 0 : index
    %0 = vector.load %arg2[%c0, %c0_0] : memref<2x256xi32, #tpu.memory_space<vmem>>, vector<2x256xi32>
    %1 = tpu.iota {dimensions = array<i32: 1>} : vector<1x4x1xi32>
    %2 = vector.shape_cast %0 : vector<2x256xi32> to vector<2x1x256xi32>
    %3 = vector.broadcast %2 : vector<2x1x256xi32> to vector<2x4x256xi32>
    %4 = vector.broadcast %1 : vector<1x4x1xi32> to vector<2x4x256xi32>
    %5 = arith.cmpi eq, %3, %4 : vector<2x4x256xi32>
    %6 = arith.extui %5 : vector<2x4x256xi1> to vector<2x4x256xi32>
    %7 = arith.sitofp %6 : vector<2x4x256xi32> to vector<2x4x256xf32>
    %c0_1 = arith.constant 0 : index
    %c0_2 = arith.constant 0 : index
    %c0_3 = arith.constant 0 : index
    %8 = vector.load %arg3[%c0_1, %c0_2, %c0_3] : memref<2x4x256xf32, #tpu.memory_space<vmem>>, vector<2x4x256xf32>
    tpu.vector_store %arg3[%c0_1, %c0_2, %c0_3], %7 {strides = array<i32>} : memref<2x4x256xf32, #tpu.memory_space<vmem>>, vector<2x4x256xf32>,
    return
  }
  func.func @transform_0(%arg0: i32, %arg1: i32) -> (i32, i32) {
    %c0_i32 = arith.constant 0 : i32
    return %arg0, %arg1 : i32, i32
  }
  func.func @transform_1(%arg0: i32, %arg1: i32) -> (i32, i32, i32) {
    %c0_i32 = arith.constant 0 : i32
    %c0_i32_0 = arith.constant 0 : i32
    return %arg0, %c0_i32, %arg1 : i32, i32, i32
  }
}

</mosaic_0001>

<llo_original>
// kernel: tpu_custom_call.1
$region0: #{tpu_custom_call.1}
  #allocation0 [shape = 'u32[]', space=smem, size = 0x4, offset = 0x4, fixed_abs, tag = 'smem constant byte address 0x4 - core index']
  #allocation1 [shape = 'u32[144,128]{1,0:T(1,128)}', space=vmem, size = 0x12000, scoped, tag = 'internal scratch']
  %s0 = inlined_call_operand.hbm [shape: s32[2,256], index: 0, kind: input, shape index: {}]
  %s1 = inlined_call_operand.hbm [shape: f32[2,4,256], index: 1, kind: output, shape index: {}]
  %s2 = sld [smem:[#allocation0]]
  $region18: #{tpu_custom_call.1} parent=0
    _
  %s4 = ssub.s32 1, %s2
  %s5 = scalar_select 0, %s4, %s2
  $region1: #{tpu_custom_call.1} parent=0
    #allocation2 [shape = 'u8[2048]{0}', space=vmem, size = 0x800, scoped, tag = 'input window, operand 0, single buffered']
    #allocation3 [shape = 's32[1]{0}', space=sflag, size = 0x4, scoped, tag = 'scoped memory for tpu_custom_call.1']
    #allocation4 [shape = 's32[1]{0}', space=sflag, size = 0x4, scoped, tag = 'scoped memory for tpu_custom_call.1']
    #allocation5 [shape = 'u8[8192]{0}', space=vmem, size = 0x2000, scoped, tag = 'output window, operand 0, single buffered']
    %6 = vsyncpa [#allocation3], 0
    %7 = vsyncpa [#allocation4], 0
    // Predicated region
    $region2: #{tpu_custom_call.1} parent=1 // pred_check
      _
    $region3: #{tpu_custom_call.1} parent=1 // pred_check_branch
      %9 = sbr.rel (0) target = $region5
    $region4: #{tpu_custom_call.1} parent=1 // pred_region
      %s11 = ssub.s32 64, 64
      %12 = vsyncadd [#allocation3], %s11
      %s14 = sshll.u32 [#allocation2], 4
      %s15 = int_to_ptr.vmem [resolvable:$true] %s14
      %17 = dma.hbm_to_vmem [thread:$0]  %s0, 64, %s15, [#allocation3]
    $region5: #{tpu_custom_call.1} parent=1 // pred_fallthru
      _
    // Predicated region
    $region6: #{tpu_custom_call.1} parent=1 // pred_check
      _
    $region7: #{tpu_custom_call.1} parent=1 // pred_check_branch
      %19 = sbr.rel (0) target = $region9
    $region8: #{tpu_custom_call.1} parent=1 // pred_region
      %20 = dma.done [#allocation3], 64
    $region9: #{tpu_custom_call.1} parent=1 // pred_fallthru
      _
    %v21 = vld [vmem:[#allocation2] sm:$0xf]
    %v22 = vlaneseq
    %v23 = vshrl.u32 %v22, 7
    %v25 = vunpack.c.l.s4 1966171168
    %v26 = vunpack.c.0.s8 %v25
    %v27 = vlaneseq
    %v28 = vshrl.u32 %v27, 7
    %v29 = vsub.s32 %v26, %v28
    %v30 = vrot.slane %v21, %v29
    %v31 = vcombine.high %v30, %v30
    %v32 = vlaneseq
    %v33 = vshrl.u32 %v32, 7
    %v34 = vsub.s32 0, %v33
    %v35 = vrot.slane %v30, %v34
    %v36 = vlaneseq
    %v37 = vshrl.u32 %v36, 7
    %v38 = vsub.s32 1, %v37
    %v39 = vrot.slane %v30, %v38
    %v40 = vlaneseq
    %v41 = vshrl.u32 %v40, 7
    %v42 = vsub.s32 0, %v41
    %v43 = vrot.slane %v31, %v42
    %v44 = vlaneseq
    %v45 = vshrl.u32 %v44, 7
    %v46 = vsub.s32 1, %v45
    %v47 = vrot.slane %v31, %v46
    %vm48 = vcmp.eq.s32.totalorder %v35, %v23
    %vm49 = vcmp.eq.s32.totalorder %v39, %v23
    %vm50 = vcmp.eq.s32.totalorder %v43, %v23
    %vm51 = vcmp.eq.s32.totalorder %v47, %v23
    %v52 = vsel %vm48, 1, 0
    %v53 = vsel %vm49, 1, 0
    %v54 = vsel %vm50, 1, 0
    %v55 = vsel %vm51, 1, 0
    %v56 = vcvt.s32.f32 %v52
    %v57 = vcvt.s32.f32 %v53
    %v58 = vcvt.s32.f32 %v54
    %v59 = vcvt.s32.f32 %v55
    %v64 = vcombine.low %v56, %v57
    %v65 = vcombine.low %v58, %v59
    %68 = vst [vmem:[#allocation5] sm:$0xff] %v64
    %69 = vst [vmem:[#allocation5 + $0x8] sm:$0xff] %v65
    // Predicated region
    $region10: #{tpu_custom_call.1} parent=1 // pred_check
      _
    $region11: #{tpu_custom_call.1} parent=1 // pred_check_branch
      %71 = sbr.rel (0) target = $region13
    $region12: #{tpu_custom_call.1} parent=1 // pred_region
      %s73 = ssub.s32 256, 256
      %74 = vsyncadd [#allocation4], %s73
      %s75 = sshll.u32 [#allocation5], 4
      %s76 = int_to_ptr.vmem [resolvable:$true] %s75
      %81 = dma.vmem_to_hbm [thread:$0]  %s76, 256, %s1, [#allocation4], 128, 128, 8
    $region13: #{tpu_custom_call.1} parent=1 // pred_fallthru
      _
    // Predicated region
    $region14: #{tpu_custom_call.1} parent=1 // pred_check
      _
    $region15: #{tpu_custom_call.1} parent=1 // pred_check_branch
      %83 = sbr.rel (0) target = $region17
    $region16: #{tpu_custom_call.1} parent=1 // pred_region
      %84 = dma.done [#allocation4], 256
    $region17: #{tpu_custom_call.1} parent=1 // pred_fallthru
      _
    %85 = vsyncpa [#allocation3], 1
    %86 = vsyncpa [#allocation4], 1

</llo_original>
